<compile_context>
chip_gen: v7x
topology: tpu7x:2x2x1
jax: 0.10.0
libtpu: 0.0.40
codegen_flags: <defaults>
</compile_context>

<pallas_src>
import jax
import jax.numpy as jnp
from jax.experimental import pallas as pl
from jax.experimental.pallas import tpu as pltpu


def _ceil_to(x: int, m: int) -> int:
    return ((x + m - 1) // m) * m


def _make_kernel(seq_len: int, s_tile: int, mask_seq_tail: bool):
    """Grid = (batch tiles [parallel], seq chunks [arbitrary, reduction last])."""

    def kernel(sent_ref, mask_ref, w1_ref, b1_ref, w2_ref, b2_ref,
               out_ref, sum_acc, cnt_acc):
        s = pl.program_id(1)
        n_s = pl.num_programs(1)

        # ---- init accumulators on the first sequence chunk ----------------
        @pl.when(s == 0)
        def _():
            sum_acc[...] = jnp.zeros_like(sum_acc)
            cnt_acc[...] = jnp.zeros_like(cnt_acc)

        def accumulate(x, m):
            # Streamed masked-sum: (bt, st, D) * (bt, st, 1), reduce sublanes.
            sum_acc[...] += jnp.sum(x * m, axis=1)            # (bt, D)
            cnt_acc[...] += jnp.sum(m, axis=1)                # (bt, 1)

        if mask_seq_tail:
            # Only the last S chunk can read past the true sequence length;
            # keep the hot path (all earlier chunks) select-free.
            @pl.when(s != n_s - 1)
            def _():
                accumulate(sent_ref[...].astype(jnp.float32),
                           mask_ref[...].astype(jnp.float32))

            @pl.when(s == n_s - 1)
            def _():
                x = sent_ref[...].astype(jnp.float32)
                m = mask_ref[...].astype(jnp.float32)
                pos = jax.lax.broadcasted_iota(jnp.int32, m.shape, 1) + s * s_tile
                valid = pos < seq_len
                # Zero both operands in the invalid tail (garbage could be
                # NaN/Inf; NaN * 0 would otherwise poison the accumulator).
                accumulate(jnp.where(valid, x, 0.0), jnp.where(valid, m, 0.0))
        else:
            accumulate(sent_ref[...].astype(jnp.float32),
                       mask_ref[...].astype(jnp.float32))

        # ---- epilogue: masked mean -> Linear -> tanh -> Linear -------------
        @pl.when(s == n_s - 1)
        def _():
            denom = jnp.maximum(cnt_acc[...], 1.0)            # (bt, 1)
            emb = sum_acc[...] / denom                        # exact, once/tile
            h = jnp.tanh(
                jnp.dot(emb.astype(w1_ref.dtype), w1_ref[...],
                        preferred_element_type=jnp.float32)
                + b1_ref[...])                                # (bt, H)
            logits = (jnp.dot(h.astype(w2_ref.dtype), w2_ref[...],
                              preferred_element_type=jnp.float32)
                      + b2_ref[...])                          # (bt, C)
            out_ref[...] = logits.astype(out_ref.dtype)

    return kernel


def single_classifier(sent, mask, w1, b1, w2, b2, *, b_tile=None, s_tile=None):
    """Fused masked-mean pooler + 2-layer classifier (idxs=[]).

    sent: (B, S, D), mask: (B, S), w1: (D, H), b1: (1, H), w2: (H, C), b2: (1, C)
    returns logits: (B, C) float32
    """
    B, S, D = sent.shape
    H = w1.shape[1]
    C = w2.shape[1]
    assert mask.shape == (B, S)
    assert w1.shape == (D, H) and b1.shape == (1, H)
    assert w2.shape == (H, C) and b2.shape == (1, C)

    # ---- generation-aware VMEM budget -------------------------------------
    try:
        info = pltpu.get_tpu_info()
        vmem_cap = int(getattr(info, "vmem_capacity_bytes", 64 * 1024 * 1024))
    except Exception:  # not on TPU / interpret mode etc.
        vmem_cap = 64 * 1024 * 1024
    # v7x (64 MiB): 8 MiB per sent buffer; v5e/v6e (128 MiB): 16 MiB per buffer.
    per_buf_budget = max(8 * 1024 * 1024, vmem_cap // 8)
    vmem_limit = min(int(vmem_cap * 3 // 4), 100 * 1024 * 1024)

    # ---- batch tile --------------------------------------------------------
    if b_tile is None:
        if B <= 8:
            b_tile = B                       # block dim == full B (allowed)
        else:
            # >= 2 batch tiles so ("parallel", ...) keeps both v7x cores busy.
            b_tile = min(128, _ceil_to(max(8, (B + 1) // 2), 8))
    else:
        b_tile = int(b_tile)
        if b_tile >= B:
            b_tile = B
        elif b_tile % 8 != 0:
            b_tile = min(B, max(8, _ceil_to(b_tile, 8)))

    # ---- sequence tile (reduction axis, last in grid) ----------------------
    elem_bytes = jnp.dtype(sent.dtype).itemsize
    row_bytes = max(1, b_tile * D * elem_bytes)
    cap = max(8, (per_buf_budget // row_bytes) // 8 * 8)
    if s_tile is None:
        s_tile = min(_ceil_to(S, 8), cap)
    else:
        s_tile = max(8, (int(s_tile) // 8) * 8)
        s_tile = min(s_tile, cap)
    if s_tile >= S:
        s_tile = S                           # single chunk == full S extent
    num_s = pl.cdiv(S, s_tile)
    mask_seq_tail = (num_s > 1) and (S % s_tile != 0)

    grid = (pl.cdiv(B, b_tile), num_s)

    # mask with the sequence axis on sublanes (tiny reshape; no sent copy).
    mask3 = mask.reshape(B, S, 1)

    kernel = _make_kernel(S, s_tile, mask_seq_tail)

    out = pl.pallas_call(
        kernel,
        out_shape=jax.ShapeDtypeStruct((B, C), jnp.float32),
        grid_spec=pltpu.PrefetchScalarGridSpec(
            num_scalar_prefetch=0,
            grid=grid,
            in_specs=[
                # Streamed / double-buffered activations; true D as last dim
                # (block dim == full array dim -> no lane padding, no pad pass).
                pl.BlockSpec((b_tile, s_tile, D), lambda i, s: (i, s, 0)),
                pl.BlockSpec((b_tile, s_tile, 1), lambda i, s: (i, s, 0)),
                # Weights / biases: full-array blocks, constant index maps
                # -> VMEM-resident across all grid steps.
                pl.BlockSpec((D, H), lambda i, s: (0, 0)),
                pl.BlockSpec((1, H), lambda i, s: (0, 0)),
                pl.BlockSpec((H, C), lambda i, s: (0, 0)),
                pl.BlockSpec((1, C), lambda i, s: (0, 0)),
            ],
            # Same output block across the S (reduction) axis; written once in
            # the epilogue.  OOB rows of a partial batch tile are dropped.
            out_specs=pl.BlockSpec((b_tile, C), lambda i, s: (i, 0)),
            scratch_shapes=[
                pltpu.VMEM((b_tile, D), jnp.float32),   # masked-sum accumulator
                pltpu.VMEM((b_tile, 1), jnp.float32),   # token-count accumulator
            ],
        ),
        compiler_params=pltpu.CompilerParams(
            dimension_semantics=("parallel", "arbitrary"),
            vmem_limit_bytes=vmem_limit,
        ),
    )(sent, mask3, w1, b1, w2, b2)
    return out


def _reference(sent, mask, w1, b1, w2, b2):
    """Plain-JAX reference matching the PyTorch forward (idxs=[])."""
    m = mask.astype(jnp.float32)
    emb = jnp.sum(sent * m[:, :, None], axis=1) / jnp.maximum(
        jnp.sum(m, axis=1, keepdims=True), 1.0)
    h = jnp.tanh(emb @ w1 + b1)
    return h @ w2 + b2


if __name__ == "__main__":
    # Small shapes consistent with "batch_size x seq_len x d_emb".
    B, S, D = 2, 8, 32     # batch, seq_len, d_emb
    H, C = 32, 4           # classifier hidden, num classes

    key = jax.random.PRNGKey(0)
    k_sent, k_w1, k_b1, k_w2, k_b2, k_sent2, k_sent3 = jax.random.split(key, 7)

    sent = jax.random.normal(k_sent, (B, S, D), dtype=jnp.float32)
    # Deterministic padding mask: first row keeps 6 tokens, second keeps all 8.
    mask = jnp.array(
        [[1, 1, 1, 1, 1, 1, 0, 0],
         [1, 1, 1, 1, 1, 1, 1, 1]], dtype=jnp.float32)

    # Deterministic synthetic parameters.
    w1 = jax.random.normal(k_w1, (D, H), dtype=jnp.float32) * 0.1
    b1 = jax.random.normal(k_b1, (1, H), dtype=jnp.float32) * 0.01
    w2 = jax.random.normal(k_w2, (H, C), dtype=jnp.float32) * 0.1
    b2 = jax.random.normal(k_b2, (1, C), dtype=jnp.float32) * 0.01

    logits = single_classifier(sent, mask, w1, b1, w2, b2)
    jax.block_until_ready(logits)
    ref = _reference(sent, mask, w1, b1, w2, b2)
    assert logits.shape == (B, C)
    assert jnp.allclose(logits, ref, atol=1e-3, rtol=1e-3), "mismatch vs reference"

    # Second check: ragged batch (20 % 8 != 0), multi-chunk S reduction with a
    # ragged tail (300 % 128 != 0), all handled without any wrapper-side pad.
    B2, S2 = 20, 300
    sent2 = jax.random.normal(k_sent2, (B2, S2, D), dtype=jnp.float32)
    lengths = (jnp.arange(B2) % S2) + 5
    mask2 = (jnp.arange(S2)[None, :] < lengths[:, None]).astype(jnp.float32)
    logits2 = single_classifier(sent2, mask2, w1, b1, w2, b2, b_tile=8, s_tile=128)
    jax.block_until_ready(logits2)
    ref2 = _reference(sent2, mask2, w1, b1, w2, b2)
    assert logits2.shape == (B2, C)
    assert jnp.allclose(logits2, ref2, atol=1e-3, rtol=1e-3), "tiled mismatch vs reference"

    # Third check: default (auto) tiling with ragged batch tail.
    B3, S3 = 10, 50
    sent3 = jax.random.normal(k_sent3, (B3, S3, D), dtype=jnp.float32)
    mask3 = (jnp.arange(S3)[None, :] < ((jnp.arange(B3) % S3) + 3)[:, None]
             ).astype(jnp.float32)
    logits3 = single_classifier(sent3, mask3, w1, b1, w2, b2)
    jax.block_until_ready(logits3)
    ref3 = _reference(sent3, mask3, w1, b1, w2, b2)
    assert logits3.shape == (B3, C)
    assert jnp.allclose(logits3, ref3, atol=1e-3, rtol=1e-3), "auto-tile mismatch vs reference"

    print("KERNEL_OK")
</pallas_src>

<mosaic_0001>
module attributes {stable_mosaic.version = 11 : i64} {
  func.func @kernel(%arg0: i32, %arg1: i32, %arg2: memref<2x8x32xf32, #tpu.memory_space<vmem>>, %arg3: memref<2x8x1xf32, #tpu.memory_space<vmem>>, %arg4: memref<32x32xf32, #tpu.memory_space<vmem>>, %arg5: memref<1x32xf32, #tpu.memory_space<vmem>>, %arg6: memref<32x4xf32, #tpu.memory_space<vmem>>, %arg7: memref<1x4xf32, #tpu.memory_space<vmem>>, %arg8: memref<2x4xf32, #tpu.memory_space<vmem>>, %arg9: memref<2x32xf32, #tpu.memory_space<vmem>>, %arg10: memref<2x1xf32, #tpu.memory_space<vmem>>) attributes {dimension_semantics = [#tpu.dimension_semantics<parallel>, #tpu.dimension_semantics<arbitrary>], iteration_bounds = array<i64: 1, 1>, scalar_prefetch = 0 : i64, scratch_operands = 2 : i64, tpu.core_type = #tpu.core_type<tc>, window_params = [{transform_indices = @transform_0, window_bounds = array<i64: 2, 8, 32>}, {transform_indices = @transform_1, window_bounds = array<i64: 2, 8, 1>}, {pipeline_mode = #tpu.pipeline_mode<synchronous>, transform_indices = @transform_2, window_bounds = array<i64: 32, 32>}, {pipeline_mode = #tpu.pipeline_mode<synchronous>, transform_indices = @transform_3, window_bounds = array<i64: 1, 32>}, {pipeline_mode = #tpu.pipeline_mode<synchronous>, transform_indices = @transform_4, window_bounds = array<i64: 32, 4>}, {pipeline_mode = #tpu.pipeline_mode<synchronous>, transform_indices = @transform_5, window_bounds = array<i64: 1, 4>}, {transform_indices = @transform_6, window_bounds = array<i64: 2, 4>}]} {
    %c0_i32 = arith.constant 0 : i32
    %0 = arith.cmpi eq, %arg1, %c0_i32 : i32
    %1 = arith.extui %0 : i1 to i32
    %c0_i32_0 = arith.constant 0 : i32
    %2 = arith.cmpi ne, %1, %c0_i32_0 : i32
    scf.if %2 {
      %cst_17 = arith.constant 0.000000e+00 : f32
      %18 = vector.broadcast %cst_17 : f32 to vector<2x32xf32>
      %c0_18 = arith.constant 0 : index
      %c0_19 = arith.constant 0 : index
      %19 = vector.load %arg9[%c0_18, %c0_19] : memref<2x32xf32, #tpu.memory_space<vmem>>, vector<2x32xf32>
      tpu.vector_store %arg9[%c0_18, %c0_19], %18 {strides = array<i32>} : memref<2x32xf32, #tpu.memory_space<vmem>>, vector<2x32xf32>,
      %cst_20 = arith.constant 0.000000e+00 : f32
      %20 = vector.broadcast %cst_20 : f32 to vector<2x1xf32>
      %c0_21 = arith.constant 0 : index
      %c0_22 = arith.constant 0 : index
      %21 = vector.load %arg10[%c0_21, %c0_22] : memref<2x1xf32, #tpu.memory_space<vmem>>, vector<2x1xf32>
      tpu.vector_store %arg10[%c0_21, %c0_22], %20 {strides = array<i32>} : memref<2x1xf32, #tpu.memory_space<vmem>>, vector<2x1xf32>,
    } else {
    }
    %c0 = arith.constant 0 : index
    %c0_1 = arith.constant 0 : index
    %c0_2 = arith.constant 0 : index
    %3 = vector.load %arg2[%c0, %c0_1, %c0_2] : memref<2x8x32xf32, #tpu.memory_space<vmem>>, vector<2x8x32xf32>
    %c0_3 = arith.constant 0 : index
    %c0_4 = arith.constant 0 : index
    %c0_5 = arith.constant 0 : index
    %4 = vector.load %arg3[%c0_3, %c0_4, %c0_5] : memref<2x8x1xf32, #tpu.memory_space<vmem>>, vector<2x8x1xf32>
    %c0_6 = arith.constant 0 : index
    %c0_7 = arith.constant 0 : index
    %5 = vector.load %arg9[%c0_6, %c0_7] : memref<2x32xf32, #tpu.memory_space<vmem>>, vector<2x32xf32>
    %6 = vector.broadcast %4 : vector<2x8x1xf32> to vector<2x8x32xf32>
    %7 = arith.mulf %3, %6 : vector<2x8x32xf32>
    %cst = arith.constant dense<0.000000e+00> : vector<2x32xf32>
    %8 = vector.multi_reduction <add>, %7, %cst [1] : vector<2x8x32xf32> to vector<2x32xf32>
    %9 = arith.addf %5, %8 : vector<2x32xf32>
    %c0_8 = arith.constant 0 : index
    %c0_9 = arith.constant 0 : index
    %10 = vector.load %arg9[%c0_8, %c0_9] : memref<2x32xf32, #tpu.memory_space<vmem>>, vector<2x32xf32>
    tpu.vector_store %arg9[%c0_8, %c0_9], %9 {strides = array<i32>} : memref<2x32xf32, #tpu.memory_space<vmem>>, vector<2x32xf32>,
    %c0_10 = arith.constant 0 : index
    %c0_11 = arith.constant 0 : index
    %11 = vector.load %arg10[%c0_10, %c0_11] : memref<2x1xf32, #tpu.memory_space<vmem>>, vector<2x1xf32>
    %cst_12 = arith.constant dense<0.000000e+00> : vector<2x1xf32>
    %12 = vector.multi_reduction <add>, %4, %cst_12 [1] : vector<2x8x1xf32> to vector<2x1xf32>
    %13 = arith.addf %11, %12 : vector<2x1xf32>
    %c0_13 = arith.constant 0 : index
    %c0_14 = arith.constant 0 : index
    %14 = vector.load %arg10[%c0_13, %c0_14] : memref<2x1xf32, #tpu.memory_space<vmem>>, vector<2x1xf32>
    tpu.vector_store %arg10[%c0_13, %c0_14], %13 {strides = array<i32>} : memref<2x1xf32, #tpu.memory_space<vmem>>, vector<2x1xf32>,
    %c0_i32_15 = arith.constant 0 : i32
    %15 = arith.cmpi eq, %arg1, %c0_i32_15 : i32
    %16 = arith.extui %15 : i1 to i32
    %c0_i32_16 = arith.constant 0 : i32
    %17 = arith.cmpi ne, %16, %c0_i32_16 : i32
    scf.if %17 {
      %c0_17 = arith.constant 0 : index
      %c0_18 = arith.constant 0 : index
      %18 = vector.load %arg10[%c0_17, %c0_18] : memref<2x1xf32, #tpu.memory_space<vmem>>, vector<2x1xf32>
      %cst_19 = arith.constant 1.000000e+00 : f32
      %19 = vector.broadcast %cst_19 : f32 to vector<2x1xf32>
      %20 = arith.maximumf %18, %19 : vector<2x1xf32>
      %c0_20 = arith.constant 0 : index
      %c0_21 = arith.constant 0 : index
      %21 = vector.load %arg9[%c0_20, %c0_21] : memref<2x32xf32, #tpu.memory_space<vmem>>, vector<2x32xf32>
      %22 = vector.broadcast %20 : vector<2x1xf32> to vector<2x32xf32>
      %23 = arith.divf %21, %22 : vector<2x32xf32>
      %c0_22 = arith.constant 0 : index
      %c0_23 = arith.constant 0 : index
      %24 = vector.load %arg4[%c0_22, %c0_23] : memref<32x32xf32, #tpu.memory_space<vmem>>, vector<32x32xf32>
      %cst_24 = arith.constant dense<0.000000e+00> : vector<2x32xf32>
      %25 = tpu.matmul %23, %24, %cst_24 {dimension_numbers = #tpu.dot_dimension_numbers<[1], [0], [0], [1], [0, 0, 1, 1], [], []>} : vector<2x32xf32>, vector<32x32xf32>, vector<2x32xf32> -> vector<2x32xf32>
      %c0_25 = arith.constant 0 : index
      %c0_26 = arith.constant 0 : index
      %26 = vector.load %arg5[%c0_25, %c0_26] : memref<1x32xf32, #tpu.memory_space<vmem>>, vector<1x32xf32>
      %27 = vector.broadcast %26 : vector<1x32xf32> to vector<2x32xf32>
      %28 = arith.addf %25, %27 : vector<2x32xf32>
      %29 = math.tanh %28 : vector<2x32xf32>
      %c0_27 = arith.constant 0 : index
      %c0_28 = arith.constant 0 : index
      %30 = vector.load %arg6[%c0_27, %c0_28] : memref<32x4xf32, #tpu.memory_space<vmem>>, vector<32x4xf32>
      %cst_29 = arith.constant dense<0.000000e+00> : vector<2x4xf32>
      %31 = tpu.matmul %29, %30, %cst_29 {dimension_numbers = #tpu.dot_dimension_numbers<[1], [0], [0], [1], [0, 0, 1, 1], [], []>} : vector<2x32xf32>, vector<32x4xf32>, vector<2x4xf32> -> vector<2x4xf32>
      %c0_30 = arith.constant 0 : index
      %c0_31 = arith.constant 0 : index
      %32 = vector.load %arg7[%c0_30, %c0_31] : memref<1x4xf32, #tpu.memory_space<vmem>>, vector<1x4xf32>
      %33 = vector.broadcast %32 : vector<1x4xf32> to vector<2x4xf32>
      %34 = arith.addf %31, %33 : vector<2x4xf32>
      %c0_32 = arith.constant 0 : index
      %c0_33 = arith.constant 0 : index
      %35 = vector.load %arg8[%c0_32, %c0_33] : memref<2x4xf32, #tpu.memory_space<vmem>>, vector<2x4xf32>
      tpu.vector_store %arg8[%c0_32, %c0_33], %34 {strides = array<i32>} : memref<2x4xf32, #tpu.memory_space<vmem>>, vector<2x4xf32>,
    } else {
    }
    return
  }
  func.func @transform_0(%arg0: i32, %arg1: i32) -> (i32, i32, i32) {
    %c0_i32 = arith.constant 0 : i32
    %c0_i32_0 = arith.constant 0 : i32
    return %arg0, %arg1, %c0_i32 : i32, i32, i32
  }
  func.func @transform_1(%arg0: i32, %arg1: i32) -> (i32, i32, i32) {
    %c0_i32 = arith.constant 0 : i32
    %c0_i32_0 = arith.constant 0 : i32
    return %arg0, %arg1, %c0_i32 : i32, i32, i32
  }
  func.func @transform_2(%arg0: i32, %arg1: i32) -> (i32, i32) {
    %c0_i32 = arith.constant 0 : i32
    %c0_i32_0 = arith.constant 0 : i32
    %c0_i32_1 = arith.constant 0 : i32
    return %c0_i32, %c0_i32_0 : i32, i32
  }
  func.func @transform_3(%arg0: i32, %arg1: i32) -> (i32, i32) {
    %c0_i32 = arith.constant 0 : i32
    %c0_i32_0 = arith.constant 0 : i32
    %c0_i32_1 = arith.constant 0 : i32
    return %c0_i32, %c0_i32_0 : i32, i32
  }
  func.func @transform_4(%arg0: i32, %arg1: i32) -> (i32, i32) {
    %c0_i32 = arith.constant 0 : i32
    %c0_i32_0 = arith.constant 0 : i32
    %c0_i32_1 = arith.constant 0 : i32
    return %c0_i32, %c0_i32_0 : i32, i32
  }
  func.func @transform_5(%arg0: i32, %arg1: i32) -> (i32, i32) {
    %c0_i32 = arith.constant 0 : i32
    %c0_i32_0 = arith.constant 0 : i32
    %c0_i32_1 = arith.constant 0 : i32
    return %c0_i32, %c0_i32_0 : i32, i32
  }
  func.func @transform_6(%arg0: i32, %arg1: i32) -> (i32, i32) {
    %c0_i32 = arith.constant 0 : i32
    %c0_i32_0 = arith.constant 0 : i32
    return %arg0, %c0_i32 : i32, i32
  }
}

</mosaic_0001>

<llo_original>
// kernel: tpu_custom_call.1
$region0: #{tpu_custom_call.1}
  #allocation0 [shape = 'u32[]', space=smem, size = 0x4, offset = 0x4, fixed_abs, tag = 'smem constant byte address 0x4 - core index']
  #allocation1 [shape = 'u32[144,128]{1,0:T(1,128)}', space=vmem, size = 0x12000, scoped, tag = 'internal scratch']
  #allocation2 [shape = 'f32[2,32]{1,0:T(2,128)}', space=vmem, size = 0x400, scoped, tag = 'scratch operand']
  #allocation3 [shape = 'f32[2,1]{1,0:T(2,128)}', space=vmem, size = 0x400, scoped, tag = 'scratch operand']
  %s0 = inlined_call_operand.vmem [shape: f32[2,8,32], index: 0, kind: input, shape index: {}]
  %s1 = inlined_call_operand.vmem [shape: f32[2,8,1], index: 1, kind: input, shape index: {}]
  %s2 = inlined_call_operand.vmem [shape: f32[32,32], index: 2, kind: input, shape index: {}]
  %s3 = inlined_call_operand.vmem [shape: f32[1,32], index: 3, kind: input, shape index: {}]
  %s4 = inlined_call_operand.vmem [shape: f32[32,4], index: 4, kind: input, shape index: {}]
  %s5 = inlined_call_operand.vmem [shape: f32[1,4], index: 5, kind: input, shape index: {}]
  %s6 = inlined_call_operand.hbm [shape: f32[2,4], index: 6, kind: output, shape index: {}]
  %s7 = sld [smem:[#allocation0]]
  $region42: #{tpu_custom_call.1} parent=0
    _
  %s9 = ssub.s32 1, %s7
  %s10 = scalar_select 0, %s9, %s7
  $region1: #{tpu_custom_call.1} parent=0
    #allocation4 [shape = 'u8[1024]{0}', space=vmem, size = 0x400, scoped, tag = 'output window, operand 0, single buffered']
    #allocation5 [shape = 's32[1]{0}', space=sflag, size = 0x4, scoped, tag = 'scoped memory for tpu_custom_call.1']
    %11 = vsyncpa [#allocation5], 0
    // Predicated region
    $region2: #{tpu_custom_call.1} parent=1 // pred_check
      _
    $region3: #{tpu_custom_call.1} parent=1 // pred_check_branch
      %13 = sbr.rel (0) target = $region5
    $region4: #{tpu_custom_call.1} parent=1 // pred_region
      _
    $region5: #{tpu_custom_call.1} parent=1 // pred_fallthru
      _
    // Predicated region
    $region6: #{tpu_custom_call.1} parent=1 // pred_check
      _
    $region7: #{tpu_custom_call.1} parent=1 // pred_check_branch
      %15 = sbr.rel (0) target = $region9
    $region8: #{tpu_custom_call.1} parent=1 // pred_region
      _
    $region9: #{tpu_custom_call.1} parent=1 // pred_fallthru
      _
    // Predicated region
    $region10: #{tpu_custom_call.1} parent=1 // pred_check
      _
    $region11: #{tpu_custom_call.1} parent=1 // pred_check_branch
      %17 = sbr.rel (0) target = $region13
    $region12: #{tpu_custom_call.1} parent=1 // pred_region
      _
    $region13: #{tpu_custom_call.1} parent=1 // pred_fallthru
      _
    // Predicated region
    $region14: #{tpu_custom_call.1} parent=1 // pred_check
      _
    $region15: #{tpu_custom_call.1} parent=1 // pred_check_branch
      %19 = sbr.rel (0) target = $region17
    $region16: #{tpu_custom_call.1} parent=1 // pred_region
      _
    $region17: #{tpu_custom_call.1} parent=1 // pred_fallthru
      _
    // Predicated region
    $region18: #{tpu_custom_call.1} parent=1 // pred_check
      _
    $region19: #{tpu_custom_call.1} parent=1 // pred_check_branch
      %21 = sbr.rel (0) target = $region21
    $region20: #{tpu_custom_call.1} parent=1 // pred_region
      _
    $region21: #{tpu_custom_call.1} parent=1 // pred_fallthru
      _
    // Predicated region
    $region22: #{tpu_custom_call.1} parent=1 // pred_check
      _
    $region23: #{tpu_custom_call.1} parent=1 // pred_check_branch
      %23 = sbr.rel (0) target = $region25
    $region24: #{tpu_custom_call.1} parent=1 // pred_region
      _
    $region25: #{tpu_custom_call.1} parent=1 // pred_fallthru
      _
    %p24 = scmp.eq.s32.totalorder 0, 0
    // Predicated region
    $region26: #{tpu_custom_call.1} parent=1 // pred_check
      %p25 = pneg %p24
    $region27: #{tpu_custom_call.1} parent=1 // pred_check_branch
      %27 = sbr.rel (%p25) target = $region29
    $region28: #{tpu_custom_call.1} parent=1 // pred_region
      %vm28 = vcmask 254976
      %29 = vst.msk [vmem:[#allocation2] sm:$0x3] %vm28, 0.0
      %vm30 = vcmask 1024
      %31 = vst.msk [vmem:[#allocation3] sm:$0x3] %vm30, 0.0
    $region29: #{tpu_custom_call.1} parent=1 // pred_fallthru
      _
    %v32 = vld [vmem:[%s0] sm:$0xff]
    %v33 = vld [vmem:[%s0 + $0x8] sm:$0xff]
    %v34 = vld [vmem:[%s1] sm:$0xff]
    %v35 = vld [vmem:[%s1 + $0x8] sm:$0xff]
    %v36 = vld [vmem:[#allocation2] sm:$0x3]
    %38 = vset.pattern.permute.xlu0 0
    %39 = vperm.xlu0 %38, %v34
    %v40 = vpop.permute.xlu0 %39
    %43 = vset.pattern.permute.xlu0 0
    %44 = vperm.xlu0 %43, %v35
    %v45 = vpop.permute.xlu0 %44
    %v47 = vmul.f32 %v32, %v40
    %v48 = vmul.f32 %v33, %v45
    %vm49 = vcmask 261120
    %v50 = vsel %vm49, %v47, 0.0
    %v51 = vrot.slane %v50, 4
    %v52 = vadd.f32 %v50, %v51
    %v53 = vrot.slane %v52, 2
    %v54 = vadd.f32 %v52, %v53
    %v55 = vrot.slane %v54, 1
    %v56 = vadd.f32 %v54, %v55
    %v57 = vsel %vm49, %v48, 0.0
    %v58 = vrot.slane %v57, 4
    %v59 = vadd.f32 %v57, %v58
    %v60 = vrot.slane %v59, 2
    %v61 = vadd.f32 %v59, %v60
    %v62 = vrot.slane %v61, 1
    %v63 = vadd.f32 %v61, %v62
    %vm66 = vcmask 1041409
    %v67 = vsel %vm66, %v63, %v56
    %v69 = vadd.f32 %v36, %v67
    %vm70 = vcmask 254976
    %71 = vst.msk [vmem:[#allocation2] sm:$0x3] %vm70, %v69
    %v72 = vld [vmem:[#allocation3] sm:$0x3]
    %vm73 = vcmask 7168
    %v74 = vsel %vm73, %v34, 0.0
    %v75 = vrot.slane %v74, 4
    %v76 = vadd.f32 %v74, %v75
    %v77 = vrot.slane %v76, 2
    %v78 = vadd.f32 %v76, %v77
    %v79 = vrot.slane %v78, 1
    %v80 = vadd.f32 %v78, %v79
    %v81 = vsel %vm73, %v35, 0.0
    %v82 = vrot.slane %v81, 4
    %v83 = vadd.f32 %v81, %v82
    %v84 = vrot.slane %v83, 2
    %v85 = vadd.f32 %v83, %v84
    %v86 = vrot.slane %v85, 1
    %v87 = vadd.f32 %v85, %v86
    %v90 = vsel %vm66, %v87, %v80
    %v92 = vadd.f32 %v72, %v90
    %vm93 = vcmask 1024
    %94 = vst.msk [vmem:[#allocation3] sm:$0x3] %vm93, %v92
    // Predicated region
    $region30: #{tpu_custom_call.1} parent=1 // pred_check
      %p95 = pneg %p24
    $region31: #{tpu_custom_call.1} parent=1 // pred_check_branch
      %97 = sbr.rel (%p95) target = $region33
    $region32: #{tpu_custom_call.1} parent=1 // pred_region
      %v98 = vld [vmem:[#allocation3] sm:$0x3]
      %v99 = vmax.f32 %v98, 1.0
      %v100 = vld [vmem:[#allocation2] sm:$0x3]
      %102 = vset.pattern.permute.xlu0 0
      %103 = vperm.xlu0 %102, %v99
      %v104 = vpop.permute.xlu0 %103
      %v106 = vrcp.pop %v104
      %v107 = vmul.f32 %v100, %v106
      %v108 = vld [vmem:[%s2] sm:$0xff]
      %v109 = vld [vmem:[%s2 + $0x8] sm:$0xff]
      %v110 = vld [vmem:[%s2 + $0x10] sm:$0xff]
      %v111 = vld [vmem:[%s2 + $0x18] sm:$0xff]
      %v112 = vld [vmem:[%s3] sm:$0x1]
      %v114 = vlaneseq
      %v115 = vshrl.u32 %v114, 7
      %v116 = vsub.s32 0, %v115
      %v117 = vrot.slane %v112, %v116
      %v120 = vsel %vm49, %v107, 0
      %122 = vmatprep.subr.mxu0 0.0
      %123 = vmatpush1.msra.mxu0 %v108
      %124 = vmatprep.subr.mxu0 0.0
      %125 = vmatpush1.msra.mxu0 %v109
      %126 = vmatprep.subr.mxu0 0.0
      %127 = vmatpush1.msra.mxu0 %v110
      %128 = vmatprep.subr.mxu0 0.0
      %129 = vmatpush1.msra.mxu0 %v111
      %130 = vmatprep.subr.mxu0 0.0
      %131 = vmatpush1.msra.mxu0 0.0
      %132 = vmatprep.subr.mxu0 0.0
      %133 = vmatpush1.msra.mxu0 0.0
      %134 = vmatprep.subr.mxu0 0.0
      %135 = vmatpush1.msra.mxu0 0.0
      %136 = vmatprep.subr.mxu0 0.0
      %137 = vmatpush1.msra.mxu0 0.0
      %138 = vmatprep.subr.mxu0 0.0
      %139 = vmatpush1.msra.mxu0 0.0
      %140 = vmatprep.subr.mxu0 0.0
      %141 = vmatpush1.msra.mxu0 0.0
      %142 = vmatprep.subr.mxu0 0.0
      %143 = vmatpush1.msra.mxu0 0.0
      %144 = vmatprep.subr.mxu0 0.0
      %145 = vmatpush1.msra.mxu0 0.0
      %146 = vmatprep.subr.mxu0 0.0
      %147 = vmatpush1.msra.mxu0 0.0
      %148 = vmatprep.subr.mxu0 0.0
      %149 = vmatpush1.msra.mxu0 0.0
      %150 = vmatprep.subr.mxu0 0.0
      %151 = vmatpush1.msra.mxu0 0.0
      %152 = vmatprep.subr.mxu0 0.0
      %153 = vmatpush1.msra.mxu0 0.0
      %154 = vmatprep.subr.mxu0 0.0
      %155 = vmatpush1.msra.mxu0 0.0
      %156 = vmatprep.subr.mxu0 0.0
      %157 = vmatpush1.msra.mxu0 0.0
      %158 = vmatprep.subr.mxu0 0.0
      %159 = vmatpush1.msra.mxu0 0.0
      %160 = vmatprep.subr.mxu0 0.0
      %161 = vmatpush1.msra.mxu0 0.0
      %162 = vmatprep.subr.mxu0 0.0
      %163 = vmatpush1.msra.mxu0 0.0
      %164 = vmatprep.subr.mxu0 0.0
      %165 = vmatpush1.msra.mxu0 0.0
      %166 = vmatprep.subr.mxu0 0.0
      %167 = vmatpush1.msra.mxu0 0.0
      %168 = vmatprep.subr.mxu0 0.0
      %169 = vmatpush1.msra.mxu0 0.0
      %170 = vmatprep.subr.mxu0 0.0
      %171 = vmatpush1.msra.mxu0 0.0
      %172 = vmatprep.subr.mxu0 0.0
      %173 = vmatpush1.msra.mxu0 0.0
      %174 = vmatprep.subr.mxu0 0.0
      %175 = vmatpush1.msra.mxu0 0.0
      %176 = vmatprep.subr.mxu0 0.0
      %177 = vmatpush1.msra.mxu0 0.0
      %178 = vmatprep.subr.mxu0 0.0
      %179 = vmatpush1.msra.mxu0 0.0
      %180 = vmatprep.subr.mxu0 0.0
      %181 = vmatpush1.msra.mxu0 0.0
      %182 = vmatprep.subr.mxu0 0.0
      %183 = vmatpush1.msra.mxu0 0.0
      %184 = vmatprep.subr.mxu0 0.0
      %185 = vmatpush1.msra.mxu0 0.0
      %186 = vmatprep.mubr.f32.mxu0 0.0
      %187 = vmatmul.mubr.f32.gmra.mrb[0].mxu0 %v120
      %v188 = vpop.f32.mrb[0].mxu0
      %v189 = vadd.f32 %v117, %v188
      %v190 = vpop.f32.mrb[0].mxu0
      %191 = vdwg.mxu0
      %v192 = vtanh.pop %v189
      %v193 = vld [vmem:[%s4] sm:$0xff]
      %v194 = vld [vmem:[%s4 + $0x8] sm:$0xff]
      %v195 = vld [vmem:[%s4 + $0x10] sm:$0xff]
      %v196 = vld [vmem:[%s4 + $0x18] sm:$0xff]
      %v197 = vld [vmem:[%s5] sm:$0x1]
      %v199 = vlaneseq
      %v200 = vshrl.u32 %v199, 7
      %v201 = vsub.s32 0, %v200
      %v202 = vrot.slane %v197, %v201
      %v205 = vsel %vm49, %v192, 0
      %207 = vmatprep.subr.mxu0 0.0
      %208 = vmatpush1.msra.mxu0 %v193
      %209 = vmatprep.subr.mxu0 0.0
      %210 = vmatpush1.msra.mxu0 %v194
      %211 = vmatprep.subr.mxu0 0.0
      %212 = vmatpush1.msra.mxu0 %v195
      %213 = vmatprep.subr.mxu0 0.0
      %214 = vmatpush1.msra.mxu0 %v196
      %215 = vmatprep.subr.mxu0 0.0
      %216 = vmatpush1.msra.mxu0 0.0
      %217 = vmatprep.subr.mxu0 0.0
      %218 = vmatpush1.msra.mxu0 0.0
      %219 = vmatprep.subr.mxu0 0.0
      %220 = vmatpush1.msra.mxu0 0.0
      %221 = vmatprep.subr.mxu0 0.0
      %222 = vmatpush1.msra.mxu0 0.0
      %223 = vmatprep.subr.mxu0 0.0
      %224 = vmatpush1.msra.mxu0 0.0
      %225 = vmatprep.subr.mxu0 0.0
      %226 = vmatpush1.msra.mxu0 0.0
      %227 = vmatprep.subr.mxu0 0.0
      %228 = vmatpush1.msra.mxu0 0.0
      %229 = vmatprep.subr.mxu0 0.0
      %230 = vmatpush1.msra.mxu0 0.0
      %231 = vmatprep.subr.mxu0 0.0
      %232 = vmatpush1.msra.mxu0 0.0
      %233 = vmatprep.subr.mxu0 0.0
      %234 = vmatpush1.msra.mxu0 0.0
      %235 = vmatprep.subr.mxu0 0.0
      %236 = vmatpush1.msra.mxu0 0.0
      %237 = vmatprep.subr.mxu0 0.0
      %238 = vmatpush1.msra.mxu0 0.0
      %239 = vmatprep.subr.mxu0 0.0
      %240 = vmatpush1.msra.mxu0 0.0
      %241 = vmatprep.subr.mxu0 0.0
      %242 = vmatpush1.msra.mxu0 0.0
      %243 = vmatprep.subr.mxu0 0.0
      %244 = vmatpush1.msra.mxu0 0.0
      %245 = vmatprep.subr.mxu0 0.0
      %246 = vmatpush1.msra.mxu0 0.0
      %247 = vmatprep.subr.mxu0 0.0
      %248 = vmatpush1.msra.mxu0 0.0
      %249 = vmatprep.subr.mxu0 0.0
      %250 = vmatpush1.msra.mxu0 0.0
      %251 = vmatprep.subr.mxu0 0.0
      %252 = vmatpush1.msra.mxu0 0.0
      %253 = vmatprep.subr.mxu0 0.0
      %254 = vmatpush1.msra.mxu0 0.0
      %255 = vmatprep.subr.mxu0 0.0
      %256 = vmatpush1.msra.mxu0 0.0
      %257 = vmatprep.subr.mxu0 0.0
      %258 = vmatpush1.msra.mxu0 0.0
      %259 = vmatprep.subr.mxu0 0.0
      %260 = vmatpush1.msra.mxu0 0.0
      %261 = vmatprep.subr.mxu0 0.0
      %262 = vmatpush1.msra.mxu0 0.0
      %263 = vmatprep.subr.mxu0 0.0
      %264 = vmatpush1.msra.mxu0 0.0
      %265 = vmatprep.subr.mxu0 0.0
      %266 = vmatpush1.msra.mxu0 0.0
      %267 = vmatprep.subr.mxu0 0.0
      %268 = vmatpush1.msra.mxu0 0.0
      %269 = vmatprep.subr.mxu0 0.0
      %270 = vmatpush1.msra.mxu0 0.0
      %271 = vmatprep.mubr.f32.mxu0 0.0
      %272 = vmatmul.mubr.f32.gmra.mrb[0].mxu0 %v205
      %v273 = vpop.f32.mrb[0].mxu0
      %v274 = vadd.f32 %v202, %v273
      %v275 = vpop.f32.mrb[0].mxu0
      %276 = vdwg.mxu0
      %vm277 = vcmask 25600
      %278 = vst.msk [vmem:[#allocation4] sm:$0x3] %vm277, %v274
    $region33: #{tpu_custom_call.1} parent=1 // pred_fallthru
      _
    // Predicated region
    $region34: #{tpu_custom_call.1} parent=1 // pred_check
      _
    $region35: #{tpu_custom_call.1} parent=1 // pred_check_branch
      %280 = sbr.rel (0) target = $region37
    $region36: #{tpu_custom_call.1} parent=1 // pred_region
      %s282 = ssub.s32 32, 32
      %283 = vsyncadd [#allocation5], %s282
      %s285 = sshll.u32 [#allocation4], 4
      %s286 = int_to_ptr.vmem [resolvable:$true] %s285
      %288 = dma.vmem_to_hbm [thread:$0]  %s286, 32, %s6, [#allocation5]
    $region37: #{tpu_custom_call.1} parent=1 // pred_fallthru
      _
    // Predicated region
    $region38: #{tpu_custom_call.1} parent=1 // pred_check
      _
    $region39: #{tpu_custom_call.1} parent=1 // pred_check_branch
      %290 = sbr.rel (0) target = $region41
    $region40: #{tpu_custom_call.1} parent=1 // pred_region
      %291 = dma.done [#allocation5], 32
    $region41: #{tpu_custom_call.1} parent=1 // pred_fallthru
      _
    %292 = vsyncpa [#allocation5], 1

</llo_original>
